<compile_context>
chip_gen: v6e
topology: v6e:2x2x1
jax: 0.10.0
libtpu: 0.0.40
codegen_flags: <defaults>
</compile_context>

<pallas_src>
import functools

import jax
import jax.numpy as jnp
from jax.experimental import pallas as pl
from jax.experimental.pallas import tpu as pltpu

HIDDEN = 128
TILE_B_MAX = 4096  # default batch-tile cap (review: 2048-4096)


def _dqn_mlp_kernel(x_ref, w1_ref, b1_ref, w2_ref, b2_ref, w3_ref, b3_ref,
                    o_ref, *, bf16_epilogue):
    # fc1: bf16 MXU operands, f32 accumulation.  (No-op cast if x is bf16.)
    x = x_ref[...].astype(jnp.bfloat16)
    h1 = jnp.dot(x, w1_ref[...], preferred_element_type=jnp.float32)
    if bf16_epilogue:
        # v6e/v7x: bf16 VALU -> bias-add + ReLU in bf16 (cast needed for the
        # next matmul anyway; halves VALU ops and staging bytes).
        h1 = jnp.maximum(h1.astype(jnp.bfloat16) + b1_ref[...], 0.0)
    else:
        # v5e: no bf16 VPU -> keep elementwise in f32, cast once for the MXU.
        h1 = jnp.maximum(h1 + b1_ref[...], 0.0).astype(jnp.bfloat16)

    # fc2 + ReLU
    h2 = jnp.dot(h1, w2_ref[...], preferred_element_type=jnp.float32)
    if bf16_epilogue:
        h2 = jnp.maximum(h2.astype(jnp.bfloat16) + b2_ref[...], 0.0)
    else:
        h2 = jnp.maximum(h2 + b2_ref[...], 0.0).astype(jnp.bfloat16)

    # fc3 (no activation); bias-add stays in f32 for output accuracy.
    out = jnp.dot(h2, w3_ref[...], preferred_element_type=jnp.float32)
    o_ref[...] = (out + b3_ref[...]).astype(o_ref.dtype)


def _round_up(x, m):
    return ((x + m - 1) // m) * m


def _has_bf16_vpu():
    """bf16 VALU exists on v6e/v7x; keep the elementwise path f32 on v5*."""
    try:
        kind = jax.devices()[0].device_kind.lower()
    except Exception:
        return True
    return "v5" not in kind


@functools.partial(jax.jit, static_argnames=("tile_b_max", "bf16_epilogue"))
def centralized_dqn_forward(x, params, *, tile_b_max=TILE_B_MAX,
                            bf16_epilogue=None):
    """Forward pass of CentralizedDQN.

    x      : (batch, input_dim) float32 or bfloat16
    params : dict with w1 (input_dim,128), b1 (1,128),
                       w2 (128,128),       b2 (1,128),
                       w3 (128,out_dim),   b3 (1,out_dim)
    returns: (batch, out_dim) float32 Q-values
    """
    if bf16_epilogue is None:
        bf16_epilogue = _has_bf16_vpu()

    # bf16 matmul operands (f32 accumulation inside the kernel).  Hidden-layer
    # biases match the epilogue dtype; output bias stays f32.
    bias_dt = jnp.bfloat16 if bf16_epilogue else jnp.float32
    w1 = params["w1"].astype(jnp.bfloat16)
    w2 = params["w2"].astype(jnp.bfloat16)
    w3 = params["w3"].astype(jnp.bfloat16)
    b1 = params["b1"].astype(bias_dt)
    b2 = params["b2"].astype(bias_dt)
    b3 = params["b3"].astype(jnp.float32)

    batch, input_dim = x.shape
    out_dim = w3.shape[1]

    # --- batch tiling --------------------------------------------------------
    #  * balanced tiles (minimize last-tile padding),
    #  * >= 2 tiles when batch >= 16 so v7x's two TensorCores both get work,
    #  * tile rows a multiple of 8 (sublane rule).
    tile_cap = max(8, int(tile_b_max))
    min_tiles = 2 if batch >= 16 else 1
    n_tiles = max(pl.cdiv(batch, tile_cap), min_tiles)
    tile_b = _round_up(pl.cdiv(batch, n_tiles), 8)
    n_tiles = pl.cdiv(batch, tile_b)
    padded = n_tiles * tile_b
    if padded != batch:
        x = jnp.pad(x, ((0, padded - batch), (0, 0)))

    flops = 2 * padded * (input_dim * HIDDEN + HIDDEN * HIDDEN
                          + HIDDEN * out_dim)
    bytes_accessed = (
        padded * input_dim * x.dtype.itemsize        # x (HBM read)
        + padded * out_dim * 4                       # output (f32 write)
        + sum(int(a.size) * a.dtype.itemsize
              for a in (w1, b1, w2, b2, w3, b3)))    # resident params (once)

    const = lambda shape: pl.BlockSpec(shape, lambda i: (0, 0))
    kernel = functools.partial(_dqn_mlp_kernel, bf16_epilogue=bf16_epilogue)

    out = pl.pallas_call(
        kernel,
        out_shape=jax.ShapeDtypeStruct((padded, out_dim), jnp.float32),
        grid=(n_tiles,),
        in_specs=[
            pl.BlockSpec((tile_b, input_dim), lambda i: (i, 0)),  # x tiles
            const(w1.shape), const(b1.shape),                      # resident
            const(w2.shape), const(b2.shape),
            const(w3.shape), const(b3.shape),
        ],
        out_specs=pl.BlockSpec((tile_b, out_dim), lambda i: (i, 0)),
        compiler_params=pltpu.CompilerParams(
            dimension_semantics=("parallel",)),
        cost_estimate=pl.CostEstimate(flops=flops, transcendentals=0,
                                      bytes_accessed=bytes_accessed),
    )(x, w1, b1, w2, b2, w3, b3)

    return out[:batch] if padded != batch else out


def init_params(key, input_dim, output_dim, hidden=HIDDEN):
    """Deterministic synthetic init (uniform, roughly PyTorch-Linear-like)."""
    ks = jax.random.split(key, 6)

    def lin(kw, kb, fan_in, fan_out):
        bound = 1.0 / jnp.sqrt(fan_in)
        w = jax.random.uniform(kw, (fan_in, fan_out), jnp.float32,
                               -bound, bound)
        b = jax.random.uniform(kb, (1, fan_out), jnp.float32, -bound, bound)
        return w, b

    w1, b1 = lin(ks[0], ks[1], input_dim, hidden)
    w2, b2 = lin(ks[2], ks[3], hidden, hidden)
    w3, b3 = lin(ks[4], ks[5], hidden, output_dim)
    return {"w1": w1, "b1": b1, "w2": w2, "b2": b2, "w3": w3, "b3": b3}


def _reference(x, p):
    """Pure f32 reference (kernel uses bf16 MXU operands, hence loose tol)."""
    h1 = jnp.maximum(x @ p["w1"] + p["b1"], 0.0)
    h2 = jnp.maximum(h1 @ p["w2"] + p["b2"], 0.0)
    return h2 @ p["w3"] + p["b3"]


if __name__ == "__main__":
    key = jax.random.PRNGKey(0)
    k_x, k_x2, k_p = jax.random.split(key, 3)

    input_dim, output_dim = 16, 4
    params = init_params(k_p, input_dim, output_dim)

    # Small single-tile case.
    x = jax.random.normal(k_x, (8, input_dim), jnp.float32)
    out = jax.block_until_ready(centralized_dqn_forward(x, params))
    ref = _reference(x, params)
    assert out.shape == (8, output_dim)
    # Loose tolerance: MXU inputs rounded to bf16 (accumulation stays f32).
    assert jnp.allclose(out, ref, atol=5e-2, rtol=5e-2), (
        f"max abs err {jnp.max(jnp.abs(out - ref))}")

    # Exercise the >=2-tile (dual-TensorCore on v7x) + padding path.
    x2 = jax.random.normal(k_x2, (20, input_dim), jnp.float32)
    out2 = jax.block_until_ready(centralized_dqn_forward(x2, params))
    ref2 = _reference(x2, params)
    assert out2.shape == (20, output_dim)
    assert jnp.allclose(out2, ref2, atol=5e-2, rtol=5e-2), (
        f"max abs err {jnp.max(jnp.abs(out2 - ref2))}")

    print("KERNEL_OK")
</pallas_src>

<mosaic_0001>
module attributes {stable_mosaic.version = 11 : i64} {
  func.func @_dqn_mlp_kernel(%arg0: i32, %arg1: memref<8x16xf32, #tpu.memory_space<vmem>>, %arg2: memref<16x128xbf16, #tpu.memory_space<vmem>>, %arg3: memref<1x128xbf16, #tpu.memory_space<vmem>>, %arg4: memref<128x128xbf16, #tpu.memory_space<vmem>>, %arg5: memref<1x128xbf16, #tpu.memory_space<vmem>>, %arg6: memref<128x4xbf16, #tpu.memory_space<vmem>>, %arg7: memref<1x4xf32, #tpu.memory_space<vmem>>, %arg8: memref<8x4xf32, #tpu.memory_space<vmem>>) attributes {dimension_semantics = [#tpu.dimension_semantics<parallel>], iteration_bounds = array<i64: 1>, scalar_prefetch = 0 : i64, scratch_operands = 0 : i64, tpu.core_type = #tpu.core_type<tc>, window_params = [{transform_indices = @transform_0, window_bounds = array<i64: 8, 16>}, {pipeline_mode = #tpu.pipeline_mode<synchronous>, transform_indices = @transform_1, window_bounds = array<i64: 16, 128>}, {pipeline_mode = #tpu.pipeline_mode<synchronous>, transform_indices = @transform_2, window_bounds = array<i64: 1, 128>}, {pipeline_mode = #tpu.pipeline_mode<synchronous>, transform_indices = @transform_3, window_bounds = array<i64: 128, 128>}, {pipeline_mode = #tpu.pipeline_mode<synchronous>, transform_indices = @transform_4, window_bounds = array<i64: 1, 128>}, {pipeline_mode = #tpu.pipeline_mode<synchronous>, transform_indices = @transform_5, window_bounds = array<i64: 128, 4>}, {pipeline_mode = #tpu.pipeline_mode<synchronous>, transform_indices = @transform_6, window_bounds = array<i64: 1, 4>}, {transform_indices = @transform_7, window_bounds = array<i64: 8, 4>}]} {
    %c0 = arith.constant 0 : index
    %c0_0 = arith.constant 0 : index
    %0 = vector.load %arg1[%c0, %c0_0] : memref<8x16xf32, #tpu.memory_space<vmem>>, vector<8x16xf32>
    %1 = arith.truncf %0 : vector<8x16xf32> to vector<8x16xbf16>
    %c0_1 = arith.constant 0 : index
    %c0_2 = arith.constant 0 : index
    %2 = vector.load %arg2[%c0_1, %c0_2] : memref<16x128xbf16, #tpu.memory_space<vmem>>, vector<16x128xbf16>
    %cst = arith.constant dense<0.000000e+00> : vector<8x128xf32>
    %3 = tpu.matmul %1, %2, %cst {dimension_numbers = #tpu.dot_dimension_numbers<[1], [0], [0], [1], [0, 0, 1, 1], [], []>} : vector<8x16xbf16>, vector<16x128xbf16>, vector<8x128xf32> -> vector<8x128xf32>
    %4 = arith.truncf %3 : vector<8x128xf32> to vector<8x128xbf16>
    %c0_3 = arith.constant 0 : index
    %c0_4 = arith.constant 0 : index
    %5 = vector.load %arg3[%c0_3, %c0_4] : memref<1x128xbf16, #tpu.memory_space<vmem>>, vector<1x128xbf16>
    %6 = vector.broadcast %5 : vector<1x128xbf16> to vector<8x128xbf16>
    %7 = arith.addf %4, %6 : vector<8x128xbf16>
    %cst_5 = arith.constant 0.000000e+00 : bf16
    %8 = vector.broadcast %cst_5 : bf16 to vector<8x128xbf16>
    %9 = arith.maximumf %7, %8 : vector<8x128xbf16>
    %c0_6 = arith.constant 0 : index
    %c0_7 = arith.constant 0 : index
    %10 = vector.load %arg4[%c0_6, %c0_7] : memref<128x128xbf16, #tpu.memory_space<vmem>>, vector<128x128xbf16>
    %cst_8 = arith.constant dense<0.000000e+00> : vector<8x128xf32>
    %11 = tpu.matmul %9, %10, %cst_8 {dimension_numbers = #tpu.dot_dimension_numbers<[1], [0], [0], [1], [0, 0, 1, 1], [], []>} : vector<8x128xbf16>, vector<128x128xbf16>, vector<8x128xf32> -> vector<8x128xf32>
    %12 = arith.truncf %11 : vector<8x128xf32> to vector<8x128xbf16>
    %c0_9 = arith.constant 0 : index
    %c0_10 = arith.constant 0 : index
    %13 = vector.load %arg5[%c0_9, %c0_10] : memref<1x128xbf16, #tpu.memory_space<vmem>>, vector<1x128xbf16>
    %14 = vector.broadcast %13 : vector<1x128xbf16> to vector<8x128xbf16>
    %15 = arith.addf %12, %14 : vector<8x128xbf16>
    %cst_11 = arith.constant 0.000000e+00 : bf16
    %16 = vector.broadcast %cst_11 : bf16 to vector<8x128xbf16>
    %17 = arith.maximumf %15, %16 : vector<8x128xbf16>
    %c0_12 = arith.constant 0 : index
    %c0_13 = arith.constant 0 : index
    %18 = vector.load %arg6[%c0_12, %c0_13] : memref<128x4xbf16, #tpu.memory_space<vmem>>, vector<128x4xbf16>
    %cst_14 = arith.constant dense<0.000000e+00> : vector<8x4xf32>
    %19 = tpu.matmul %17, %18, %cst_14 {dimension_numbers = #tpu.dot_dimension_numbers<[1], [0], [0], [1], [0, 0, 1, 1], [], []>} : vector<8x128xbf16>, vector<128x4xbf16>, vector<8x4xf32> -> vector<8x4xf32>
    %c0_15 = arith.constant 0 : index
    %c0_16 = arith.constant 0 : index
    %20 = vector.load %arg7[%c0_15, %c0_16] : memref<1x4xf32, #tpu.memory_space<vmem>>, vector<1x4xf32>
    %21 = vector.broadcast %20 : vector<1x4xf32> to vector<8x4xf32>
    %22 = arith.addf %19, %21 : vector<8x4xf32>
    %c0_17 = arith.constant 0 : index
    %c0_18 = arith.constant 0 : index
    %23 = vector.load %arg8[%c0_17, %c0_18] : memref<8x4xf32, #tpu.memory_space<vmem>>, vector<8x4xf32>
    tpu.vector_store %arg8[%c0_17, %c0_18], %22 {strides = array<i32>} : memref<8x4xf32, #tpu.memory_space<vmem>>, vector<8x4xf32>,
    return
  }
  func.func @transform_0(%arg0: i32) -> (i32, i32) {
    %c0_i32 = arith.constant 0 : i32
    %c0_i32_0 = arith.constant 0 : i32
    return %arg0, %c0_i32 : i32, i32
  }
  func.func @transform_1(%arg0: i32) -> (i32, i32) {
    %c0_i32 = arith.constant 0 : i32
    %c0_i32_0 = arith.constant 0 : i32
    %c0_i32_1 = arith.constant 0 : i32
    return %c0_i32, %c0_i32_0 : i32, i32
  }
  func.func @transform_2(%arg0: i32) -> (i32, i32) {
    %c0_i32 = arith.constant 0 : i32
    %c0_i32_0 = arith.constant 0 : i32
    %c0_i32_1 = arith.constant 0 : i32
    return %c0_i32, %c0_i32_0 : i32, i32
  }
  func.func @transform_3(%arg0: i32) -> (i32, i32) {
    %c0_i32 = arith.constant 0 : i32
    %c0_i32_0 = arith.constant 0 : i32
    %c0_i32_1 = arith.constant 0 : i32
    return %c0_i32, %c0_i32_0 : i32, i32
  }
  func.func @transform_4(%arg0: i32) -> (i32, i32) {
    %c0_i32 = arith.constant 0 : i32
    %c0_i32_0 = arith.constant 0 : i32
    %c0_i32_1 = arith.constant 0 : i32
    return %c0_i32, %c0_i32_0 : i32, i32
  }
  func.func @transform_5(%arg0: i32) -> (i32, i32) {
    %c0_i32 = arith.constant 0 : i32
    %c0_i32_0 = arith.constant 0 : i32
    %c0_i32_1 = arith.constant 0 : i32
    return %c0_i32, %c0_i32_0 : i32, i32
  }
  func.func @transform_6(%arg0: i32) -> (i32, i32) {
    %c0_i32 = arith.constant 0 : i32
    %c0_i32_0 = arith.constant 0 : i32
    %c0_i32_1 = arith.constant 0 : i32
    return %c0_i32, %c0_i32_0 : i32, i32
  }
  func.func @transform_7(%arg0: i32) -> (i32, i32) {
    %c0_i32 = arith.constant 0 : i32
    %c0_i32_0 = arith.constant 0 : i32
    return %arg0, %c0_i32 : i32, i32
  }
}

</mosaic_0001>

<llo_original>
// kernel: centralized_dqn_forward.1
$region0: #{centralized_dqn_forward.1}
  #allocation0 [shape = 'u32[]', space=smem, size = 0x4, offset = 0x4, fixed_abs, tag = 'smem constant byte address 0x4 - core index']
  #allocation1 [shape = 'u32[144,128]{1,0:T(1,128)}', space=vmem, size = 0x12000, scoped, tag = 'internal scratch']
  %s0 = inlined_call_operand.vmem [shape: f32[8,16], index: 0, kind: input, shape index: {}]
  %s1 = inlined_call_operand.vmem [shape: bf16[16,128], index: 1, kind: input, shape index: {}]
  %s2 = inlined_call_operand.vmem [shape: bf16[1,128], index: 2, kind: input, shape index: {}]
  %s3 = inlined_call_operand.vmem [shape: bf16[128,128], index: 3, kind: input, shape index: {}]
  %s4 = inlined_call_operand.vmem [shape: bf16[1,128], index: 4, kind: input, shape index: {}]
  %s5 = inlined_call_operand.vmem [shape: bf16[128,4], index: 5, kind: input, shape index: {}]
  %s6 = inlined_call_operand.vmem [shape: f32[1,4], index: 6, kind: input, shape index: {}]
  %s7 = inlined_call_operand.vmem [shape: f32[8,4], index: 7, kind: output, shape index: {}]
  %s8 = sld [smem:[#allocation0]]
  $region38: #{centralized_dqn_forward.1} parent=0
    _
  %s10 = ssub.s32 1, %s8
  %s11 = scalar_select 0, %s10, %s8
  // Predicated region
  $region2: #{centralized_dqn_forward.1} parent=0 // pred_check
    _
  $region3: #{centralized_dqn_forward.1} parent=0 // pred_check_branch
    %13 = sbr.rel (0) target = $region5
  $region4: #{centralized_dqn_forward.1} parent=0 // pred_region
    _
  $region5: #{centralized_dqn_forward.1} parent=0 // pred_fallthru
    _
  // Predicated region
  $region6: #{centralized_dqn_forward.1} parent=0 // pred_check
    _
  $region7: #{centralized_dqn_forward.1} parent=0 // pred_check_branch
    %15 = sbr.rel (0) target = $region9
  $region8: #{centralized_dqn_forward.1} parent=0 // pred_region
    _
  $region9: #{centralized_dqn_forward.1} parent=0 // pred_fallthru
    _
  // Predicated region
  $region10: #{centralized_dqn_forward.1} parent=0 // pred_check
    _
  $region11: #{centralized_dqn_forward.1} parent=0 // pred_check_branch
    %17 = sbr.rel (0) target = $region13
  $region12: #{centralized_dqn_forward.1} parent=0 // pred_region
    _
  $region13: #{centralized_dqn_forward.1} parent=0 // pred_fallthru
    _
  // Predicated region
  $region14: #{centralized_dqn_forward.1} parent=0 // pred_check
    _
  $region15: #{centralized_dqn_forward.1} parent=0 // pred_check_branch
    %19 = sbr.rel (0) target = $region17
  $region16: #{centralized_dqn_forward.1} parent=0 // pred_region
    _
  $region17: #{centralized_dqn_forward.1} parent=0 // pred_fallthru
    _
  // Predicated region
  $region18: #{centralized_dqn_forward.1} parent=0 // pred_check
    _
  $region19: #{centralized_dqn_forward.1} parent=0 // pred_check_branch
    %21 = sbr.rel (0) target = $region21
  $region20: #{centralized_dqn_forward.1} parent=0 // pred_region
    _
  $region21: #{centralized_dqn_forward.1} parent=0 // pred_fallthru
    _
  // Predicated region
  $region22: #{centralized_dqn_forward.1} parent=0 // pred_check
    _
  $region23: #{centralized_dqn_forward.1} parent=0 // pred_check_branch
    %23 = sbr.rel (0) target = $region25
  $region24: #{centralized_dqn_forward.1} parent=0 // pred_region
    _
  $region25: #{centralized_dqn_forward.1} parent=0 // pred_fallthru
    _
  // Predicated region
  $region26: #{centralized_dqn_forward.1} parent=0 // pred_check
    _
  $region27: #{centralized_dqn_forward.1} parent=0 // pred_check_branch
    %25 = sbr.rel (0) target = $region29
  $region28: #{centralized_dqn_forward.1} parent=0 // pred_region
    _
  $region29: #{centralized_dqn_forward.1} parent=0 // pred_fallthru
    _
  %v27 = vld [vmem:[%s0] sm:$0xff]
  %v28 = vpack.c.bf16 %v27, %v27
  %v29 = vld [vmem:[%s1] sm:$0xf]
  %v30 = vld [vmem:[%s1 + $0x4] sm:$0xf]
  %v33 = vunpack.c.l.b16 %v29
  %v34 = vunpack.c.l.b16 %v30
  %v35 = vpack.c.b16 %v34, %v33
  %vm37 = vcmask 130048
  %v39 = vsel %vm37, %v28, 0
  %41 = vmatprep.subr.bf16.mxu0 0
  %42 = vmatpush1.bf16.msra.mxu0 0
  %43 = vmatprep.subr.bf16.mxu0 0
  %44 = vmatpush1.bf16.msra.mxu0 0
  %45 = vmatprep.subr.bf16.mxu0 0
  %46 = vmatpush1.bf16.msra.mxu0 0
  %47 = vmatprep.subr.bf16.mxu0 0
  %48 = vmatpush1.bf16.msra.mxu0 0
  %49 = vmatprep.subr.bf16.mxu0 0
  %50 = vmatpush1.bf16.msra.mxu0 0
  %51 = vmatprep.subr.bf16.mxu0 0
  %52 = vmatpush1.bf16.msra.mxu0 0
  %53 = vmatprep.subr.bf16.mxu0 0
  %54 = vmatpush1.bf16.msra.mxu0 0
  %55 = vmatprep.subr.bf16.mxu0 0
  %56 = vmatpush1.bf16.msra.mxu0 %v35
  %57 = vmatprep.subr.bf16.mxu0 0
  %58 = vmatpush2.bf16.msra.mxu0 0
  %59 = vmatprep.subr.bf16.mxu0 0
  %60 = vmatpush2.bf16.msra.mxu0 0
  %61 = vmatprep.subr.bf16.mxu0 0
  %62 = vmatpush2.bf16.msra.mxu0 0
  %63 = vmatprep.subr.bf16.mxu0 0
  %64 = vmatpush2.bf16.msra.mxu0 0
  %65 = vmatprep.subr.bf16.mxu0 0
  %66 = vmatpush2.bf16.msra.mxu0 0
  %67 = vmatprep.subr.bf16.mxu0 0
  %68 = vmatpush2.bf16.msra.mxu0 0
  %69 = vmatprep.subr.bf16.mxu0 0
  %70 = vmatpush2.bf16.msra.mxu0 0
  %71 = vmatprep.subr.bf16.mxu0 0
  %72 = vmatpush2.bf16.msra.mxu0 0
  %73 = vmatprep.mubr.bf16.mxu0 0
  %74 = vmatmul.mubr.bf16.gmra.mxu0 %v39
  %v75 = vpop.f32.mrf.mxu0
  %v76 = vadd.f32 0.0, %v75
  %v77 = vpop.f32.mrf.mxu0
  %v78 = vpop.f32.mrf.mxu0
  %v79 = vpop.f32.mrf.mxu0
  %80 = vdwg.mxu0
  %v81 = vpack.c.bf16 %v76, %v76
  %v82 = vld [vmem:[%s2] sm:$0x1]
  %v84 = vpack.i.b16 %v82, %v82
  %v86 = vlaneseq
  %v87 = vshrl.u32 %v86, 7
  %v88 = vsub.s32 0, %v87
  %v89 = vrot.slane %v84, %v88
  %v90 = vadd.bf16 %v81, %v89
  %v91 = vmax.bf16 %v90, 0
  %v92 = vld [vmem:[%s3] sm:$0xf]
  %v93 = vld [vmem:[%s3 + $0x4] sm:$0xf]
  %v94 = vld [vmem:[%s3 + $0x8] sm:$0xf]
  %v95 = vld [vmem:[%s3 + $0xc] sm:$0xf]
  %v96 = vld [vmem:[%s3 + $0x10] sm:$0xf]
  %v97 = vld [vmem:[%s3 + $0x14] sm:$0xf]
  %v98 = vld [vmem:[%s3 + $0x18] sm:$0xf]
  %v99 = vld [vmem:[%s3 + $0x1c] sm:$0xf]
  %v100 = vld [vmem:[%s3 + $0x20] sm:$0xf]
  %v101 = vld [vmem:[%s3 + $0x24] sm:$0xf]
  %v102 = vld [vmem:[%s3 + $0x28] sm:$0xf]
  %v103 = vld [vmem:[%s3 + $0x2c] sm:$0xf]
  %v104 = vld [vmem:[%s3 + $0x30] sm:$0xf]
  %v105 = vld [vmem:[%s3 + $0x34] sm:$0xf]
  %v106 = vld [vmem:[%s3 + $0x38] sm:$0xf]
  %v107 = vld [vmem:[%s3 + $0x3c] sm:$0xf]
  %v124 = vunpack.c.l.b16 %v92
  %v125 = vunpack.c.l.b16 %v93
  %v126 = vunpack.c.l.b16 %v94
  %v127 = vunpack.c.l.b16 %v95
  %v128 = vunpack.c.l.b16 %v96
  %v129 = vunpack.c.l.b16 %v97
  %v130 = vunpack.c.l.b16 %v98
  %v131 = vunpack.c.l.b16 %v99
  %v132 = vunpack.c.l.b16 %v100
  %v133 = vunpack.c.l.b16 %v101
  %v134 = vunpack.c.l.b16 %v102
  %v135 = vunpack.c.l.b16 %v103
  %v136 = vunpack.c.l.b16 %v104
  %v137 = vunpack.c.l.b16 %v105
  %v138 = vunpack.c.l.b16 %v106
  %v139 = vunpack.c.l.b16 %v107
  %v140 = vpack.c.b16 %v125, %v124
  %v141 = vpack.c.b16 %v127, %v126
  %v142 = vpack.c.b16 %v129, %v128
  %v143 = vpack.c.b16 %v131, %v130
  %v144 = vpack.c.b16 %v133, %v132
  %v145 = vpack.c.b16 %v135, %v134
  %v146 = vpack.c.b16 %v137, %v136
  %v147 = vpack.c.b16 %v139, %v138
  %156 = vmatprep.subr.bf16.mxu0 0
  %157 = vmatpush1.bf16.msra.mxu0 %v147
  %158 = vmatprep.subr.bf16.mxu0 0
  %159 = vmatpush1.bf16.msra.mxu0 %v146
  %160 = vmatprep.subr.bf16.mxu0 0
  %161 = vmatpush1.bf16.msra.mxu0 %v145
  %162 = vmatprep.subr.bf16.mxu0 0
  %163 = vmatpush1.bf16.msra.mxu0 %v144
  %164 = vmatprep.subr.bf16.mxu0 0
  %165 = vmatpush1.bf16.msra.mxu0 %v143
  %166 = vmatprep.subr.bf16.mxu0 0
  %167 = vmatpush1.bf16.msra.mxu0 %v142
  %168 = vmatprep.subr.bf16.mxu0 0
  %169 = vmatpush1.bf16.msra.mxu0 %v141
  %170 = vmatprep.subr.bf16.mxu0 0
  %171 = vmatpush1.bf16.msra.mxu0 %v140
  %172 = vmatprep.subr.bf16.mxu0 0
  %173 = vmatpush2.bf16.msra.mxu0 0
  %174 = vmatprep.subr.bf16.mxu0 0
  %175 = vmatpush2.bf16.msra.mxu0 0
  %176 = vmatprep.subr.bf16.mxu0 0
  %177 = vmatpush2.bf16.msra.mxu0 0
  %178 = vmatprep.subr.bf16.mxu0 0
  %179 = vmatpush2.bf16.msra.mxu0 0
  %180 = vmatprep.subr.bf16.mxu0 0
  %181 = vmatpush2.bf16.msra.mxu0 0
  %182 = vmatprep.subr.bf16.mxu0 0
  %183 = vmatpush2.bf16.msra.mxu0 0
  %184 = vmatprep.subr.bf16.mxu0 0
  %185 = vmatpush2.bf16.msra.mxu0 0
  %186 = vmatprep.subr.bf16.mxu0 0
  %187 = vmatpush2.bf16.msra.mxu0 0
  %188 = vmatprep.mubr.bf16.mxu0 0
  %189 = vmatmul.mubr.bf16.gmra.mxu0 %v91
  %v190 = vpop.f32.mrf.mxu0
  %v191 = vadd.f32 0.0, %v190
  %v192 = vpop.f32.mrf.mxu0
  %v193 = vpop.f32.mrf.mxu0
  %v194 = vpop.f32.mrf.mxu0
  %195 = vdwg.mxu0
  %v196 = vpack.c.bf16 %v191, %v191
  %v197 = vld [vmem:[%s4] sm:$0x1]
  %v199 = vpack.i.b16 %v197, %v197
  %v201 = vlaneseq
  %v202 = vshrl.u32 %v201, 7
  %v203 = vsub.s32 0, %v202
  %v204 = vrot.slane %v199, %v203
  %v205 = vadd.bf16 %v196, %v204
  %v206 = vmax.bf16 %v205, 0
  %v207 = vld [vmem:[%s5] sm:$0xf]
  %v208 = vld [vmem:[%s5 + $0x4] sm:$0xf]
  %v209 = vld [vmem:[%s5 + $0x8] sm:$0xf]
  %v210 = vld [vmem:[%s5 + $0xc] sm:$0xf]
  %v211 = vld [vmem:[%s5 + $0x10] sm:$0xf]
  %v212 = vld [vmem:[%s5 + $0x14] sm:$0xf]
  %v213 = vld [vmem:[%s5 + $0x18] sm:$0xf]
  %v214 = vld [vmem:[%s5 + $0x1c] sm:$0xf]
  %v215 = vld [vmem:[%s5 + $0x20] sm:$0xf]
  %v216 = vld [vmem:[%s5 + $0x24] sm:$0xf]
  %v217 = vld [vmem:[%s5 + $0x28] sm:$0xf]
  %v218 = vld [vmem:[%s5 + $0x2c] sm:$0xf]
  %v219 = vld [vmem:[%s5 + $0x30] sm:$0xf]
  %v220 = vld [vmem:[%s5 + $0x34] sm:$0xf]
  %v221 = vld [vmem:[%s5 + $0x38] sm:$0xf]
  %v222 = vld [vmem:[%s5 + $0x3c] sm:$0xf]
  %v223 = vld [vmem:[%s6] sm:$0x1]
  %v225 = vlaneseq
  %v226 = vshrl.u32 %v225, 7
  %v227 = vsub.s32 0, %v226
  %v228 = vrot.slane %v223, %v227
  %v246 = vunpack.c.l.b16 %v207
  %v247 = vunpack.c.l.b16 %v208
  %v248 = vunpack.c.l.b16 %v209
  %v249 = vunpack.c.l.b16 %v210
  %v250 = vunpack.c.l.b16 %v211
  %v251 = vunpack.c.l.b16 %v212
  %v252 = vunpack.c.l.b16 %v213
  %v253 = vunpack.c.l.b16 %v214
  %v254 = vunpack.c.l.b16 %v215
  %v255 = vunpack.c.l.b16 %v216
  %v256 = vunpack.c.l.b16 %v217
  %v257 = vunpack.c.l.b16 %v218
  %v258 = vunpack.c.l.b16 %v219
  %v259 = vunpack.c.l.b16 %v220
  %v260 = vunpack.c.l.b16 %v221
  %v261 = vunpack.c.l.b16 %v222
  %v262 = vpack.c.b16 %v247, %v246
  %v263 = vpack.c.b16 %v249, %v248
  %v264 = vpack.c.b16 %v251, %v250
  %v265 = vpack.c.b16 %v253, %v252
  %v266 = vpack.c.b16 %v255, %v254
  %v267 = vpack.c.b16 %v257, %v256
  %v268 = vpack.c.b16 %v259, %v258
  %v269 = vpack.c.b16 %v261, %v260
  %278 = vmatprep.subr.bf16.mxu0 0
  %279 = vmatpush1.bf16.msra.mxu0 %v269
  %280 = vmatprep.subr.bf16.mxu0 0
  %281 = vmatpush1.bf16.msra.mxu0 %v268
  %282 = vmatprep.subr.bf16.mxu0 0
  %283 = vmatpush1.bf16.msra.mxu0 %v267
  %284 = vmatprep.subr.bf16.mxu0 0
  %285 = vmatpush1.bf16.msra.mxu0 %v266
  %286 = vmatprep.subr.bf16.mxu0 0
  %287 = vmatpush1.bf16.msra.mxu0 %v265
  %288 = vmatprep.subr.bf16.mxu0 0
  %289 = vmatpush1.bf16.msra.mxu0 %v264
  %290 = vmatprep.subr.bf16.mxu0 0
  %291 = vmatpush1.bf16.msra.mxu0 %v263
  %292 = vmatprep.subr.bf16.mxu0 0
  %293 = vmatpush1.bf16.msra.mxu0 %v262
  %294 = vmatprep.subr.bf16.mxu0 0
  %295 = vmatpush2.bf16.msra.mxu0 0
  %296 = vmatprep.subr.bf16.mxu0 0
  %297 = vmatpush2.bf16.msra.mxu0 0
  %298 = vmatprep.subr.bf16.mxu0 0
  %299 = vmatpush2.bf16.msra.mxu0 0
  %300 = vmatprep.subr.bf16.mxu0 0
  %301 = vmatpush2.bf16.msra.mxu0 0
  %302 = vmatprep.subr.bf16.mxu0 0
  %303 = vmatpush2.bf16.msra.mxu0 0
  %304 = vmatprep.subr.bf16.mxu0 0
  %305 = vmatpush2.bf16.msra.mxu0 0
  %306 = vmatprep.subr.bf16.mxu0 0
  %307 = vmatpush2.bf16.msra.mxu0 0
  %308 = vmatprep.subr.bf16.mxu0 0
  %309 = vmatpush2.bf16.msra.mxu0 0
  %310 = vmatprep.mubr.bf16.mxu0 0
  %311 = vmatmul.mubr.bf16.gmra.mxu0 %v206
  %v312 = vpop.f32.mrf.mxu0
  %v313 = vadd.f32 %v228, %v312
  %v314 = vpop.f32.mrf.mxu0
  %v315 = vpop.f32.mrf.mxu0
  %v316 = vpop.f32.mrf.mxu0
  %317 = vdwg.mxu0
  %vm318 = vcmask 31744
  %319 = vst.msk [vmem:[%s7] sm:$0xff] %vm318, %v313
  // Predicated region
  $region30: #{centralized_dqn_forward.1} parent=0 // pred_check
    _
  $region31: #{centralized_dqn_forward.1} parent=0 // pred_check_branch
    %321 = sbr.rel (0) target = $region33
  $region32: #{centralized_dqn_forward.1} parent=0 // pred_region
    _
  $region33: #{centralized_dqn_forward.1} parent=0 // pred_fallthru
    _
  // Predicated region
  $region34: #{centralized_dqn_forward.1} parent=0 // pred_check
    _
  $region35: #{centralized_dqn_forward.1} parent=0 // pred_check_branch
    %323 = sbr.rel (0) target = $region37
  $region36: #{centralized_dqn_forward.1} parent=0 // pred_region
    _
  $region37: #{centralized_dqn_forward.1} parent=0 // pred_fallthru
    _

</llo_original>
